<compile_context>
chip_gen: v5e
topology: v5e:2x2
jax: 0.10.0
libtpu: 0.0.40
codegen_flags: <defaults>
</compile_context>

<pallas_src>
import functools
import math

import numpy as np
import jax
import jax.numpy as jnp
from jax.experimental import pallas as pl
from jax.experimental.pallas import tpu as pltpu


def _round_up(x, m):
    return (x + m - 1) // m * m


# ---------------- Fused Pallas kernel (transposed, rows-in-lanes layout) ----------------

def _fused_mlp_pos_kernel(bid_ref,        # scalar prefetch: [num_tiles] int32 (SMEM)
                          xT_ref,         # (n_pad, TM)   features + pos in last row
                          w_ref,          # (1, nh, n_pad + nh)  [W1^T | W2^T]
                          c_ref,          # (1, nh, 4)    cols: [b1, b2, freq, phase]
                          o_ref,          # (nh, TM)
                          *, n_pad, xc_branch):
    xT = xT_ref[...]                      # (n_pad, TM)
    w = w_ref[0]                          # (nh, n_pad + nh)
    w1t = w[:, :n_pad]                    # (nh, n_pad)  (pos/pad columns are zero)
    w2t = w[:, n_pad:]                    # (nh, nh)
    c = c_ref[0]                          # (nh, 4)
    b1 = c[:, 0:1]                        # (nh, 1) -> broadcast across lanes
    b2 = c[:, 1:2]
    freq = c[:, 2:3]
    phase = c[:, 3:4]

    # MLP (transposed): relu(W1^T @ xT + b1) then W2^T @ h + b2.
    h = jnp.dot(w1t, xT, preferred_element_type=jnp.float32) + b1     # (nh, TM)
    h = jnp.maximum(h, 0.0)
    y = jnp.dot(w2t, h, preferred_element_type=jnp.float32) + b2      # (nh, TM)

    bid = bid_ref[pl.program_id(0)]

    @pl.when(bid != xc_branch)
    def _():
        # Positional encoding: sin(pos*freq + phase) reproduces the sin/cos
        # interleave of the reference module (phase = 0 / pi/2).
        pos = xT[n_pad - 1:, :]                       # (1, TM) sublane row
        o_ref[...] = y + jnp.sin(pos * freq + phase)  # (nh, TM)

    @pl.when(bid == xc_branch)
    def _():
        o_ref[...] = y


def _fused_call(bid, x_all_T, w_all, c_all, *, tm, nh, n_pad, num_tiles, num_branches):
    kernel = functools.partial(_fused_mlp_pos_kernel,
                               n_pad=n_pad, xc_branch=num_branches - 1)
    grid_spec = pltpu.PrefetchScalarGridSpec(
        num_scalar_prefetch=1,
        grid=(num_tiles,),
        in_specs=[
            pl.BlockSpec((n_pad, tm), lambda i, b: (0, i)),
            pl.BlockSpec((1, nh, n_pad + nh), lambda i, b: (b[i], 0, 0)),
            pl.BlockSpec((1, nh, 4), lambda i, b: (b[i], 0, 0)),
        ],
        out_specs=pl.BlockSpec((nh, tm), lambda i, b: (0, i)),
    )
    return pl.pallas_call(
        kernel,
        out_shape=jax.ShapeDtypeStruct((nh, num_tiles * tm), jnp.float32),
        grid_spec=grid_spec,
        compiler_params=pltpu.CompilerParams(
            dimension_semantics=("parallel",),     # independent row tiles
            vmem_limit_bytes=32 * 1024 * 1024,     # plenty even at tm=4096
        ),
    )(bid, x_all_T, w_all, c_all)


# ---------------- Parameters (deterministic init) ----------------

def init_linear(key, n_in, n_out):
    kw, kb = jax.random.split(key)
    bound = 1.0 / math.sqrt(n_in)
    w = jax.random.uniform(kw, (n_in, n_out), jnp.float32, -bound, bound)
    b = jax.random.uniform(kb, (1, n_out), jnp.float32, -bound, bound)
    return w, b


def init_params(key, nTup, nxc, nh):
    params = {"lnLst": [], "lnXc": None}
    keys = jax.random.split(key, len(nTup) + 1)
    for n, k in zip(nTup, keys[:-1]):
        k1, k2 = jax.random.split(k)
        params["lnLst"].append((init_linear(k1, n, nh), init_linear(k2, nh, nh)))
    k1, k2 = jax.random.split(keys[-1])
    params["lnXc"] = (init_linear(k1, nxc, nh), init_linear(k2, nh, nh))
    return params


def pack_params(params, nTup, nxc, nh, n_pad):
    """Pack per-branch weights, transposed, into branch-indexed stacks (done once)."""
    K = len(nTup)
    widths = tuple(nTup) + (nxc,)
    w_all = np.zeros((K + 1, nh, n_pad + nh), np.float32)   # [W1^T | W2^T]
    c_all = np.zeros((K + 1, nh, 4), np.float32)            # [b1, b2, freq, phase]
    for k, n in enumerate(widths):
        (w1, b1), (w2, b2) = (params["lnLst"][k] if k < K else params["lnXc"])
        w_all[k, :, :n] = np.asarray(w1).T        # columns n..n_pad-1 (pad/pos) stay zero
        w_all[k, :, n_pad:] = np.asarray(w2).T
        c_all[k, :, 0] = np.asarray(b1)[0]
        c_all[k, :, 1] = np.asarray(b2)[0]

    # Positional-encoding constants: penc[j] = sin(pos*freq[j] + phase[j]),
    # freq[j] = pi/(j//2 + 1), phase[j] = 0 (even j) or pi/2 (odd j).
    j = np.arange(nh)
    c_all[:K, :, 2] = np.pi / (j // 2 + 1)
    c_all[:K, :, 3] = np.where(j % 2 == 0, 0.0, np.pi / 2)
    # xc branch (index K) keeps zero freq/phase; the kernel skips penc for it anyway.
    return jnp.asarray(w_all), jnp.asarray(c_all)


# ---------------- Forward (input assembly in JAX, hot path in one kernel) ----------------

def input_feature_forward(packed, xTup, pTup, xc, *, nh, n_pad, tile_m=2048):
    w_all, c_all = packed
    K = len(xTup)
    B = xc.shape[0]

    # Assemble transposed branch columns: (n_pad, rows_k), pos folded in last row.
    branch_cols = []
    row_counts = []
    for k, x in enumerate(xTup):
        Bk, L, n = x.shape
        m = Bk * L
        xf = x.astype(jnp.float32).reshape(m, n).T            # (n, m)
        pf = pTup[k].astype(jnp.float32).reshape(1, m)         # (1, m)
        zpad = jnp.zeros((n_pad - n - 1, m), jnp.float32)
        branch_cols.append(jnp.concatenate([xf, zpad, pf], axis=0))
        row_counts.append(m)
    xcT = xc.astype(jnp.float32).T                             # (nxc, B)
    xcp = jnp.concatenate(
        [xcT, jnp.zeros((n_pad - xc.shape[1], B), jnp.float32)], axis=0)
    branch_cols.append(xcp)
    row_counts.append(B)

    # Row tile: lane axis, so it must be a multiple of 128.
    tm = min(_round_up(tile_m, 128), _round_up(max(row_counts), 128))
    assert tm % 128 == 0, tm
    padded_counts = [_round_up(m, tm) for m in row_counts]
    x_all_T = jnp.concatenate(
        [jnp.pad(c, ((0, 0), (0, pm - m)))
         for c, m, pm in zip(branch_cols, row_counts, padded_counts)],
        axis=1)                                                # (n_pad, sum(pm))
    bid = jnp.concatenate(
        [jnp.full((pm // tm,), k, jnp.int32) for k, pm in enumerate(padded_counts)])
    num_tiles = int(sum(pm // tm for pm in padded_counts))

    out_T = _fused_call(bid, x_all_T, w_all, c_all,
                        tm=tm, nh=nh, n_pad=n_pad,
                        num_tiles=num_tiles, num_branches=K + 1)
    out_all = out_T.T                                          # (sum(pm), nh)

    # Re-assemble into [B, sum(L)+1, nh].
    pieces = []
    off = 0
    for k, x in enumerate(xTup):
        Bk, L, _ = x.shape
        pieces.append(out_all[off:off + Bk * L].reshape(Bk, L, nh))
        off += padded_counts[k]
    out_c = out_all[off:off + B]
    return jnp.concatenate(pieces + [out_c[:, None, :]], axis=1)


# ---------------- Pure-JAX reference (mirrors the PyTorch module) ----------------

def ref_forward(params, xTup, pTup, xc):
    def lin2(x, p):
        (w1, b1), (w2, b2) = p
        return jnp.maximum(x @ w1 + b1, 0.0) @ w2 + b2

    def getPos(pos, nh):
        cols = []
        for i in range(nh // 2):
            cols.append(jnp.sin(pos / (i + 1) * jnp.pi))
            cols.append(jnp.cos(pos / (i + 1) * jnp.pi))
        return jnp.stack(cols, axis=-1)

    nh = params["lnXc"][1][0].shape[1]
    outLst = []
    for k, x in enumerate(xTup):
        outLst.append(lin2(x, params["lnLst"][k]) + getPos(pTup[k], nh))
    outC = lin2(xc, params["lnXc"])
    return jnp.concatenate(outLst + [outC[:, None, :]], axis=1)


# ---------------- Main ----------------

if __name__ == "__main__":
    B = 2
    nTup = (4, 6)       # feature width of each tuple branch
    Ls = (8, 5)         # sequence length of each tuple branch
    nxc = 5
    nh = 32             # must be even (getPos fills pairs of channels)

    key = jax.random.PRNGKey(0)
    kp, *kd = jax.random.split(key, 2 + 2 * len(nTup) + 1)

    params = init_params(kp, nTup, nxc, nh)
    n_pad = _round_up(max(max(nTup), nxc) + 1, 8)   # +1 row for folded pos
    packed = pack_params(params, nTup, nxc, nh, n_pad)

    xTup = []
    pTup = []
    for idx, (n, L) in enumerate(zip(nTup, Ls)):
        xTup.append(jax.random.normal(kd[2 * idx], (B, L, n), jnp.float32))
        pTup.append(jax.random.uniform(kd[2 * idx + 1], (B, L), jnp.float32, 0.0, 10.0))
    xc = jax.random.normal(kd[-1], (B, nxc), jnp.float32)

    out = input_feature_forward(packed, xTup, pTup, xc, nh=nh, n_pad=n_pad)
    out = jax.block_until_ready(out)

    expected_shape = (B, sum(Ls) + 1, nh)
    assert out.shape == expected_shape, (out.shape, expected_shape)

    ref = jax.block_until_ready(ref_forward(params, xTup, pTup, xc))
    np.testing.assert_allclose(np.asarray(out), np.asarray(ref), rtol=1e-2, atol=1e-3)

    print("KERNEL_OK")
</pallas_src>

<mosaic_0001>
module attributes {stable_mosaic.version = 11 : i64} {
  func.func @_fused_mlp_pos_kernel(%arg0: i32, %arg1: memref<3xi32, #tpu.memory_space<smem>>, %arg2: memref<8x128xf32, #tpu.memory_space<vmem>>, %arg3: memref<1x32x40xf32, #tpu.memory_space<vmem>>, %arg4: memref<1x32x4xf32, #tpu.memory_space<vmem>>, %arg5: memref<32x128xf32, #tpu.memory_space<vmem>>) attributes {dimension_semantics = [#tpu.dimension_semantics<parallel>], iteration_bounds = array<i64: 3>, scalar_prefetch = 1 : i64, scratch_operands = 0 : i64, tpu.core_type = #tpu.core_type<tc>, window_params = [{transform_indices = @transform_0, window_bounds = array<i64: 8, 128>}, {transform_indices = @transform_1, window_bounds = array<i64: 1, 32, 40>}, {transform_indices = @transform_2, window_bounds = array<i64: 1, 32, 4>}, {transform_indices = @transform_3, window_bounds = array<i64: 32, 128>}]} {
    %c0 = arith.constant 0 : index
    %c0_0 = arith.constant 0 : index
    %0 = vector.load %arg2[%c0, %c0_0] : memref<8x128xf32, #tpu.memory_space<vmem>>, vector<8x128xf32>
    %c0_1 = arith.constant 0 : index
    %c0_2 = arith.constant 0 : index
    %c0_3 = arith.constant 0 : index
    %1 = vector.load %arg3[%c0_1, %c0_2, %c0_3] : memref<1x32x40xf32, #tpu.memory_space<vmem>>, vector<1x32x40xf32>
    %2 = vector.shape_cast %1 : vector<1x32x40xf32> to vector<32x40xf32>
    %3 = vector.extract_strided_slice %2 {offsets = [0, 0], sizes = [32, 8], strides = [1, 1]} : vector<32x40xf32> to vector<32x8xf32>
    %4 = vector.extract_strided_slice %2 {offsets = [0, 8], sizes = [32, 32], strides = [1, 1]} : vector<32x40xf32> to vector<32x32xf32>
    %c0_4 = arith.constant 0 : index
    %c0_5 = arith.constant 0 : index
    %c0_6 = arith.constant 0 : index
    %5 = vector.load %arg4[%c0_4, %c0_5, %c0_6] : memref<1x32x4xf32, #tpu.memory_space<vmem>>, vector<1x32x4xf32>
    %6 = vector.shape_cast %5 : vector<1x32x4xf32> to vector<32x4xf32>
    %7 = vector.extract_strided_slice %6 {offsets = [0, 0], sizes = [32, 1], strides = [1, 1]} : vector<32x4xf32> to vector<32x1xf32>
    %8 = vector.extract_strided_slice %6 {offsets = [0, 1], sizes = [32, 1], strides = [1, 1]} : vector<32x4xf32> to vector<32x1xf32>
    %9 = vector.extract_strided_slice %6 {offsets = [0, 2], sizes = [32, 1], strides = [1, 1]} : vector<32x4xf32> to vector<32x1xf32>
    %10 = vector.extract_strided_slice %6 {offsets = [0, 3], sizes = [32, 1], strides = [1, 1]} : vector<32x4xf32> to vector<32x1xf32>
    %cst = arith.constant dense<0.000000e+00> : vector<32x128xf32>
    %11 = tpu.matmul %3, %0, %cst {dimension_numbers = #tpu.dot_dimension_numbers<[1], [0], [0], [1], [0, 0, 1, 1], [], []>} : vector<32x8xf32>, vector<8x128xf32>, vector<32x128xf32> -> vector<32x128xf32>
    %12 = vector.broadcast %7 : vector<32x1xf32> to vector<32x128xf32>
    %13 = arith.addf %11, %12 : vector<32x128xf32>
    %cst_7 = arith.constant 0.000000e+00 : f32
    %14 = vector.broadcast %cst_7 : f32 to vector<32x128xf32>
    %15 = arith.maximumf %13, %14 : vector<32x128xf32>
    %cst_8 = arith.constant dense<0.000000e+00> : vector<32x128xf32>
    %16 = tpu.matmul %4, %15, %cst_8 {dimension_numbers = #tpu.dot_dimension_numbers<[1], [0], [0], [1], [0, 0, 1, 1], [], []>} : vector<32x32xf32>, vector<32x128xf32>, vector<32x128xf32> -> vector<32x128xf32>
    %17 = vector.broadcast %8 : vector<32x1xf32> to vector<32x128xf32>
    %18 = arith.addf %16, %17 : vector<32x128xf32>
    %19 = arith.index_cast %arg0 : i32 to index
    %20 = memref.load %arg1[%19] : memref<3xi32, #tpu.memory_space<smem>>
    %c2_i32 = arith.constant 2 : i32
    %21 = arith.cmpi ne, %20, %c2_i32 : i32
    %22 = arith.extui %21 : i1 to i32
    %c0_i32 = arith.constant 0 : i32
    %23 = arith.cmpi ne, %22, %c0_i32 : i32
    scf.if %23 {
      %27 = vector.extract_strided_slice %0 {offsets = [7, 0], sizes = [1, 128], strides = [1, 1]} : vector<8x128xf32> to vector<1x128xf32>
      %28 = vector.broadcast %27 : vector<1x128xf32> to vector<32x128xf32>
      %29 = vector.broadcast %9 : vector<32x1xf32> to vector<32x128xf32>
      %30 = arith.mulf %28, %29 : vector<32x128xf32>
      %31 = vector.broadcast %10 : vector<32x1xf32> to vector<32x128xf32>
      %32 = arith.addf %30, %31 : vector<32x128xf32>
      %33 = math.sin %32 : vector<32x128xf32>
      %34 = arith.addf %18, %33 : vector<32x128xf32>
      %c0_11 = arith.constant 0 : index
      %c0_12 = arith.constant 0 : index
      %35 = vector.load %arg5[%c0_11, %c0_12] : memref<32x128xf32, #tpu.memory_space<vmem>>, vector<32x128xf32>
      tpu.vector_store %arg5[%c0_11, %c0_12], %34 {strides = array<i32>} : memref<32x128xf32, #tpu.memory_space<vmem>>, vector<32x128xf32>,
    } else {
    }
    %c2_i32_9 = arith.constant 2 : i32
    %24 = arith.cmpi eq, %20, %c2_i32_9 : i32
    %25 = arith.extui %24 : i1 to i32
    %c0_i32_10 = arith.constant 0 : i32
    %26 = arith.cmpi ne, %25, %c0_i32_10 : i32
    scf.if %26 {
      %c0_11 = arith.constant 0 : index
      %c0_12 = arith.constant 0 : index
      %27 = vector.load %arg5[%c0_11, %c0_12] : memref<32x128xf32, #tpu.memory_space<vmem>>, vector<32x128xf32>
      tpu.vector_store %arg5[%c0_11, %c0_12], %18 {strides = array<i32>} : memref<32x128xf32, #tpu.memory_space<vmem>>, vector<32x128xf32>,
    } else {
    }
    return
  }
  func.func @transform_0(%arg0: i32, %arg1: memref<3xi32, #tpu.memory_space<smem>>) -> (i32, i32) {
    %c0_i32 = arith.constant 0 : i32
    %c0_i32_0 = arith.constant 0 : i32
    return %c0_i32, %arg0 : i32, i32
  }
  func.func @transform_1(%arg0: i32, %arg1: memref<3xi32, #tpu.memory_space<smem>>) -> (i32, i32, i32) {
    %0 = arith.index_cast %arg0 : i32 to index
    %1 = memref.load %arg1[%0] : memref<3xi32, #tpu.memory_space<smem>>
    %c0_i32 = arith.constant 0 : i32
    %c0_i32_0 = arith.constant 0 : i32
    %c0_i32_1 = arith.constant 0 : i32
    return %1, %c0_i32, %c0_i32_0 : i32, i32, i32
  }
  func.func @transform_2(%arg0: i32, %arg1: memref<3xi32, #tpu.memory_space<smem>>) -> (i32, i32, i32) {
    %0 = arith.index_cast %arg0 : i32 to index
    %1 = memref.load %arg1[%0] : memref<3xi32, #tpu.memory_space<smem>>
    %c0_i32 = arith.constant 0 : i32
    %c0_i32_0 = arith.constant 0 : i32
    %c0_i32_1 = arith.constant 0 : i32
    return %1, %c0_i32, %c0_i32_0 : i32, i32, i32
  }
  func.func @transform_3(%arg0: i32, %arg1: memref<3xi32, #tpu.memory_space<smem>>) -> (i32, i32) {
    %c0_i32 = arith.constant 0 : i32
    %c0_i32_0 = arith.constant 0 : i32
    return %c0_i32, %arg0 : i32, i32
  }
}

</mosaic_0001>

<llo_original>
// kernel: tpu_custom_call.1
$region0: #{tpu_custom_call.1}
  #allocation0 [shape = 'u32[]', space=smem, size = 0x4, offset = 0x4, fixed_abs, tag = 'smem constant byte address 0x4 - core index']
  #allocation1 [shape = 'u32[72,128]{1,0:T(1,128)}', space=vmem, size = 0x9000, scoped, tag = 'internal scratch']
  #allocation2 [shape = 's32[1]{0}', space=sflag, size = 0x4, scoped, tag = 'scoped memory for tpu_custom_call.1']
  #allocation3 [shape = 'u8[512]{0}', space=smem, size = 0x200, scoped, tag = 'prefetched SMEM operand 0']
  %s0 = inlined_call_operand.vmem [shape: s32[3], index: 0, kind: input, shape index: {}]
  %s1 = inlined_call_operand.hbm [shape: f32[8,384], index: 1, kind: input, shape index: {}]
  %s2 = inlined_call_operand.vmem [shape: f32[3,32,40], index: 2, kind: input, shape index: {}]
  %s3 = inlined_call_operand.vmem [shape: f32[3,32,4], index: 3, kind: input, shape index: {}]
  %s4 = inlined_call_operand.hbm [shape: f32[32,384], index: 4, kind: output, shape index: {}]
  %s5 = sld [smem:[#allocation0]]
  $region57: #{tpu_custom_call.1} parent=0
    _
  %s7 = ssub.s32 1, %s5
  %s8 = scalar_select 0, %s7, %s5
  %s10 = sshll.u32 %s0, 4
  %s11 = int_to_ptr.vmem [resolvable:$true] %s10
  %13 = dma.vmem_to_smem %s11, 16, [#allocation3], [#allocation2]
  %15 = dma.done [#allocation2], 16
  %16 = sfence
  $region1: #{tpu_custom_call.1} parent=0
    #allocation4 [shape = 'u8[8192]{0}', space=vmem, size = 0x2000, scoped, tag = 'input window, operand 1']
    #allocation5 [shape = 's32[2]{0}', space=sflag, size = 0x8, scoped, tag = 'scoped memory for tpu_custom_call.1']
    #allocation6 [shape = 's32[2]{0}', space=sflag, size = 0x8, scoped, tag = 'scoped memory for tpu_custom_call.1']
    #allocation7 [shape = 'u8[32768]{0}', space=vmem, size = 0x8000, scoped, tag = 'output window, operand 0']
    %17 = vsyncpa [#allocation5], 0
    %s18 = scalar_lea.sflag [#allocation5], 1
    %19 = vsyncpa %s18, 0
    %20 = vsyncpa [#allocation6], 0
    %s21 = scalar_lea.sflag [#allocation6], 1
    %22 = vsyncpa %s21, 0
    loop: start=0, step=1, limit=5
    $region2: #{tpu_custom_call.1} parent=1 // loop_pre_header
      _
    $region3: #{tpu_custom_call.1} parent=1 // loop_header
      %s24 = sphi 0, %s28
      %p25 = scmp.ge.s32.totalorder %s24, 5
      %s34 = sphi 0, %s36
      %s37 = sphi 0, %s34
      %s38 = sphi 0, %s37
      %s54 = sphi 0, %s38
      %s62 = sphi 0, %s64
      %s65 = sphi 0, %s62
      %s66 = sphi 0, %s65
      %s82 = sphi 0, %s66
      %s90 = sphi 0, %s92
      %s93 = sphi 0, %s90
      %s94 = sphi 0, %s93
      %s110 = sphi 0, %s94
      %s116 = sphi 0, %s118
      %s119 = sphi 0, %s116
      %s120 = sphi 0, %s119
      %s136 = sphi 0, %s120
    $region4: #{tpu_custom_call.1} parent=1 // loop_header_branch
      %27 = sbr.rel (%p25) target = $region8
    $region5: #{tpu_custom_call.1} parent=1 // loop_body
      %s29 = ssub.s32 %s24, 1
      %s30 = ssub.s32 %s24, 2
      %s31 = sadd.s32 %s24, 1
      %s32 = ssub.s32 %s24, %s31
      %p33 = scmp.eq.s32.totalorder %s32, 0
      %s35 = sadd.s32 %s34, 1
      %s36 = scalar_select %p33, %s34, %s35
      %p39 = pneg %p33
      %p40 = scmp.eq.s32.totalorder %s24, 2
      %p41 = por %p39, %p40
      %p42 = scmp.ne.s32.totalorder %s34, %s37
      %p43 = scmp.eq.s32.totalorder %s24, 0
      %p44 = por %p42, %p43
      %p45 = scmp.ne.s32.totalorder %s34, %s37
      %p46 = scmp.eq.s32.totalorder %s29, 2
      %p47 = por %p45, %p46
      %p48 = scmp.ne.s32.totalorder %s37, %s38
      %p49 = scmp.eq.s32.totalorder %s29, 0
      %p50 = por %p48, %p49
      %p51 = scmp.ne.s32.totalorder %s37, %s38
      %p52 = scmp.eq.s32.totalorder %s30, 2
      %p53 = por %p51, %p52
      %p55 = scmp.ne.s32.totalorder %s38, %s54
      %p56 = scmp.eq.s32.totalorder %s30, 0
      %p57 = por %p55, %p56
      %s58 = sld [smem:[#allocation3 + %s24]]
      %s59 = sld [smem:[#allocation3 + %s31]]
      %s60 = ssub.s32 %s58, %s59
      %p61 = scmp.eq.s32.totalorder %s60, 0
      %s63 = sadd.s32 %s62, 1
      %s64 = scalar_select %p61, %s62, %s63
      %p67 = pneg %p61
      %p68 = scmp.eq.s32.totalorder %s24, 2
      %p69 = por %p67, %p68
      %p70 = scmp.ne.s32.totalorder %s62, %s65
      %p71 = scmp.eq.s32.totalorder %s24, 0
      %p72 = por %p70, %p71
      %p73 = scmp.ne.s32.totalorder %s62, %s65
      %p74 = scmp.eq.s32.totalorder %s29, 2
      %p75 = por %p73, %p74
      %p76 = scmp.ne.s32.totalorder %s65, %s66
      %p77 = scmp.eq.s32.totalorder %s29, 0
      %p78 = por %p76, %p77
      %p79 = scmp.ne.s32.totalorder %s65, %s66
      %p80 = scmp.eq.s32.totalorder %s30, 2
      %p81 = por %p79, %p80
      %p83 = scmp.ne.s32.totalorder %s66, %s82
      %p84 = scmp.eq.s32.totalorder %s30, 0
      %p85 = por %p83, %p84
      %s86 = sld [smem:[#allocation3 + %s24]]
      %s87 = sld [smem:[#allocation3 + %s31]]
      %s88 = ssub.s32 %s86, %s87
      %p89 = scmp.eq.s32.totalorder %s88, 0
      %s91 = sadd.s32 %s90, 1
      %s92 = scalar_select %p89, %s90, %s91
      %p95 = pneg %p89
      %p96 = scmp.eq.s32.totalorder %s24, 2
      %p97 = por %p95, %p96
      %p98 = scmp.ne.s32.totalorder %s90, %s93
      %p99 = scmp.eq.s32.totalorder %s24, 0
      %p100 = por %p98, %p99
      %p101 = scmp.ne.s32.totalorder %s90, %s93
      %p102 = scmp.eq.s32.totalorder %s29, 2
      %p103 = por %p101, %p102
      %p104 = scmp.ne.s32.totalorder %s93, %s94
      %p105 = scmp.eq.s32.totalorder %s29, 0
      %p106 = por %p104, %p105
      %p107 = scmp.ne.s32.totalorder %s93, %s94
      %p108 = scmp.eq.s32.totalorder %s30, 2
      %p109 = por %p107, %p108
      %p111 = scmp.ne.s32.totalorder %s94, %s110
      %p112 = scmp.eq.s32.totalorder %s30, 0
      %p113 = por %p111, %p112
      %s114 = ssub.s32 %s24, %s31
      %p115 = scmp.eq.s32.totalorder %s114, 0
      %s117 = sadd.s32 %s116, 1
      %s118 = scalar_select %p115, %s116, %s117
      %p121 = pneg %p115
      %p122 = scmp.eq.s32.totalorder %s24, 2
      %p123 = por %p121, %p122
      %p124 = scmp.ne.s32.totalorder %s116, %s119
      %p125 = scmp.eq.s32.totalorder %s24, 0
      %p126 = por %p124, %p125
      %p127 = scmp.ne.s32.totalorder %s116, %s119
      %p128 = scmp.eq.s32.totalorder %s29, 2
      %p129 = por %p127, %p128
      %p130 = scmp.ne.s32.totalorder %s119, %s120
      %p131 = scmp.eq.s32.totalorder %s29, 0
      %p132 = por %p130, %p131
      %p133 = scmp.ne.s32.totalorder %s119, %s120
      %p134 = scmp.eq.s32.totalorder %s30, 2
      %p135 = por %p133, %p134
      %p137 = scmp.ne.s32.totalorder %s120, %s136
      %p138 = scmp.eq.s32.totalorder %s30, 0
      %p139 = por %p137, %p138
      %p140 = scmp.le.s32.totalorder 1, %s24
      %p141 = scmp.lt.s32.totalorder %s24, 4
      %p142 = pnand %p140, %p141
      %p143 = pneg %p142
      // Predicated region
      $region9: #{tpu_custom_call.1} parent=5 // pred_check
        _
      $region10: #{tpu_custom_call.1} parent=5 // pred_check_branch
        %145 = sbr.rel (%p142) target = $region12
      $region11: #{tpu_custom_call.1} parent=5 // pred_region
        %s146 = ssub.s32 %s24, 1
      $region12: #{tpu_custom_call.1} parent=5 // pred_fallthru
        _
      %p147 = scmp.lt.s32.totalorder %s24, 3
      // Predicated region
      $region13: #{tpu_custom_call.1} parent=5 // pred_check
        %p148 = pneg %p147
      $region14: #{tpu_custom_call.1} parent=5 // pred_check_branch
        %150 = sbr.rel (%p148) target = $region16
      $region15: #{tpu_custom_call.1} parent=5 // pred_region
        // Predicated region
        $region17: #{tpu_custom_call.1} parent=15 // pred_check
          %p151 = pneg %p44
        $region18: #{tpu_custom_call.1} parent=15 // pred_check_branch
          %153 = sbr.rel (%p151) target = $region20
        $region19: #{tpu_custom_call.1} parent=15 // pred_region
          %s154 = sand.u32 %s34, 1
          %s155 = scalar_lea.sflag [#allocation5], %s154
          %s156 = sand.u32 %s34, 1
          %s157 = smul.addr %s156, 8
          %s158 = scalar_lea.vmem [#allocation4], %s157
          %160 = vsyncadd %s155, 0
          %s161 = smul.addr %s24, 8
          %s162 = scalar_lea.hbm %s1, %s161
          %s164 = sshll.u32 %s162, 4
          %s165 = int_to_ptr.hbm [resolvable:$true] %s164
          %s166 = sshll.u32 %s158, 4
          %s167 = int_to_ptr.vmem [resolvable:$true] %s166
          %169 = dma.hbm_to_vmem [thread:$0]  %s165, 128, %s167, %s155
        $region20: #{tpu_custom_call.1} parent=15 // pred_fallthru
          _
        // Predicated region
        $region21: #{tpu_custom_call.1} parent=15 // pred_check
          %p170 = pneg %p72
        $region22: #{tpu_custom_call.1} parent=15 // pred_check_branch
          %172 = sbr.rel (%p170) target = $region24
        $region23: #{tpu_custom_call.1} parent=15 // pred_region
          %s173 = sld [smem:[#allocation3 + %s24]]
          %p174 = scmp.lt.s32.totalorder %s173, 2
          %s175 = scalar_select %p174, %s173, 2
          %s176 = smul.addr %s175, 4
          %s177 = smul.addr %s176, 8
          %s178 = scalar_lea.vmem %s2, %s177
          %s179 = sld [smem:[#allocation3 + %s24]]
        $region24: #{tpu_custom_call.1} parent=15 // pred_fallthru
          _
        // Predicated region
        $region25: #{tpu_custom_call.1} parent=15 // pred_check
          %p180 = pneg %p100
        $region26: #{tpu_custom_call.1} parent=15 // pred_check_branch
          %182 = sbr.rel (%p180) target = $region28
        $region27: #{tpu_custom_call.1} parent=15 // pred_region
          %s183 = sld [smem:[#allocation3 + %s24]]
          %p184 = scmp.lt.s32.totalorder %s183, 2
          %s185 = scalar_select %p184, %s183, 2
          %s186 = smul.addr %s185, 4
          %s187 = smul.addr %s186, 8
          %s188 = scalar_lea.vmem %s3, %s187
          %s189 = sld [smem:[#allocation3 + %s24]]
        $region28: #{tpu_custom_call.1} parent=15 // pred_fallthru
          _
      $region16: #{tpu_custom_call.1} parent=5 // pred_fallthru
        _
      %p190 = scmp.le.s32.totalorder 1, %s24
      %p191 = scmp.lt.s32.totalorder %s24, 4
      %p192 = pnand %p190, %p191
      %p193 = pneg %p192
      // Predicated region
      $region29: #{tpu_custom_call.1} parent=5 // pred_check
        _
      $region30: #{tpu_custom_call.1} parent=5 // pred_check_branch
        %195 = sbr.rel (%p192) target = $region32
      $region31: #{tpu_custom_call.1} parent=5 // pred_region
        %s196 = ssub.s32 %s24, 1
        %s197 = sand.u32 %s37, 1
        %s198 = scalar_lea.sflag [#allocation5], %s197
        %s199 = sand.u32 %s37, 1
        %s200 = smul.addr %s199, 8
        %s201 = scalar_lea.vmem [#allocation4], %s200
        // Predicated region
        $region33: #{tpu_custom_call.1} parent=31 // pred_check
          %p202 = pneg %p50
        $region34: #{tpu_custom_call.1} parent=31 // pred_check_branch
          %204 = sbr.rel (%p202) target = $region36
        $region35: #{tpu_custom_call.1} parent=31 // pred_region
          %206 = dma.done %s198, 128
        $region36: #{tpu_custom_call.1} parent=31 // pred_fallthru
          _
        %s207 = sand.u32 %s37, 1
        %s208 = scalar_lea.sflag [#allocation5], %s207
        %s209 = sand.u32 %s37, 1
        %s210 = smul.addr %s209, 8
        %s211 = scalar_lea.vmem [#allocation4], %s210
        %p212 = pneg %p50
        %p213 = pneg %p47
        %s214 = sld [smem:[#allocation3 + %s29]]
        %p215 = scmp.lt.s32.totalorder %s214, 2
        %s216 = scalar_select %p215, %s214, 2
        %s217 = smul.addr %s216, 4
        %s218 = smul.addr %s217, 8
        %s219 = scalar_lea.vmem %s2, %s218
        %p220 = pneg %p78
        %p221 = pneg %p75
        %s222 = sld [smem:[#allocation3 + %s29]]
        %p223 = scmp.lt.s32.totalorder %s222, 2
        %s224 = scalar_select %p223, %s222, 2
        %s225 = smul.addr %s224, 4
        %s226 = smul.addr %s225, 8
        %s227 = scalar_lea.vmem %s3, %s226
        %p228 = pneg %p106
        %p229 = pneg %p103
        %p230 = pneg %p132
        %p231 = pneg %p129
        %s232 = sand.u32 %s119, 1
        %s233 = scalar_lea.sflag [#allocation6], %s232
        %s234 = sand.u32 %s119, 1
        %s235 = smul.addr %s234, 32
        %s236 = scalar_lea.vmem [#allocation7], %s235
        %s237 = sld [smem:[#allocation3 + %s29]]
        %p238 = scmp.lt.s32.totalorder %s237, 2
        %s239 = scalar_select %p238, %s237, 2
        %s240 = smul.addr %s239, 4
        %s241 = smul.addr %s240, 8
        %s242 = scalar_lea.vmem %s2, %s241
        %s243 = sld [smem:[#allocation3 + %s29]]
        %s244 = sld [smem:[#allocation3 + %s29]]
        %p245 = scmp.lt.s32.totalorder %s244, 2
        %s246 = scalar_select %p245, %s244, 2
        %s247 = smul.addr %s246, 4
        %s248 = smul.addr %s247, 8
        %s249 = scalar_lea.vmem %s3, %s248
        %s250 = sld [smem:[#allocation3 + %s29]]
        %v251 = vld [vmem:[%s201] sm:$0xff]
        %v252 = vld [vmem:[%s242] sm:$0xff]
        %v253 = vld [vmem:[%s242 + $0x8] sm:$0xff]
        %v254 = vld [vmem:[%s242 + $0x10] sm:$0xff]
        %v255 = vld [vmem:[%s242 + $0x18] sm:$0xff]
        %v256 = vld [vmem:[%s249] sm:$0xff]
        %v257 = vld [vmem:[%s249 + $0x8] sm:$0xff]
        %v258 = vld [vmem:[%s249 + $0x10] sm:$0xff]
        %v259 = vld [vmem:[%s249 + $0x18] sm:$0xff]
        %261 = vset.pattern.permute.xlu0 0
        %262 = vperm.xlu0 %261, %v256
        %v263 = vpop.permute.xlu0 %262
        %266 = vset.pattern.permute.xlu0 0
        %267 = vperm.xlu0 %266, %v257
        %v268 = vpop.permute.xlu0 %267
        %271 = vset.pattern.permute.xlu0 0
        %272 = vperm.xlu0 %271, %v258
        %v273 = vpop.permute.xlu0 %272
        %276 = vset.pattern.permute.xlu0 0
        %277 = vperm.xlu0 %276, %v259
        %v278 = vpop.permute.xlu0 %277
        %vm280 = vcmask 64512
        %v282 = vsel %vm280, %v252, 0
        %v285 = vsel %vm280, %v253, 0
        %v288 = vsel %vm280, %v254, 0
        %v291 = vsel %vm280, %v255, 0
        %293 = vmatpush.msra.mxu0 0.0
        %294 = vmatpush.msra.mxu0 0.0
        %295 = vmatpush.msra.mxu0 0.0
        %296 = vmatpush.msra.mxu0 0.0
        %297 = vmatpush.msra.mxu0 0.0
        %298 = vmatpush.msra.mxu0 0.0
        %299 = vmatpush.msra.mxu0 0.0
        %300 = vmatpush.msra.mxu0 0.0
        %301 = vmatpush.msra.mxu0 0.0
        %302 = vmatpush.msra.mxu0 0.0
        %303 = vmatpush.msra.mxu0 0.0
        %304 = vmatpush.msra.mxu0 0.0
        %305 = vmatpush.msra.mxu0 0.0
        %306 = vmatpush.msra.mxu0 0.0
        %307 = vmatpush.msra.mxu0 0.0
        %308 = vmatpush.msra.mxu0 %v251
        %309 = vmatmul.f32.gmra.mxu0 %v282
        %v310 = vpop.f32.mrf.mxu0
        %v311 = vadd.f32 %v263, %v310
        %312 = vmatmul.f32.gmra.mxu0 %v285
        %v313 = vpop.f32.mrf.mxu0
        %v314 = vadd.f32 %v268, %v313
        %315 = vmatmul.f32.gmra.mxu0 %v288
        %v316 = vpop.f32.mrf.mxu0
        %v317 = vadd.f32 %v273, %v316
        %318 = vmatmul.f32.gmra.mxu0 %v291
        %v319 = vpop.f32.mrf.mxu0
        %v320 = vadd.f32 %v278, %v319
        %321 = vdwg.mxu0
        %v322 = vmax.f32 %v311, 0.0
        %v323 = vmax.f32 %v314, 0.0
        %v324 = vmax.f32 %v317, 0.0
        %v325 = vmax.f32 %v320, 0.0
        %326 = vset.pattern.permute.xlu0 1
        %327 = vperm.xlu0 %326, %v256
        %v328 = vpop.permute.xlu0 %327
        %330 = vset.pattern.permute.xlu0 1
        %331 = vperm.xlu0 %330, %v257
        %v332 = vpop.permute.xlu0 %331
        %334 = vset.pattern.permute.xlu0 1
        %335 = vperm.xlu0 %334, %v258
        %v336 = vpop.permute.xlu0 %335
        %338 = vset.pattern.permute.xlu0 1
        %339 = vperm.xlu0 %338, %v259
        %v340 = vpop.permute.xlu0 %339
        %342 = vrot.lane.b32.xlu0 %v252, 120
        %v343 = vpop.permute.xlu0 %342
        %344 = vrot.lane.b32.xlu0 %v253, 120
        %v345 = vpop.permute.xlu0 %344
        %346 = vrot.lane.b32.xlu0 %v254, 120
        %v347 = vpop.permute.xlu0 %346
        %348 = vrot.lane.b32.xlu0 %v255, 120
        %v349 = vpop.permute.xlu0 %348
        %vm350 = vcmask 261120
        %v351 = vsel %vm350, %v343, 0
        %v353 = vsel %vm350, %v345, 0
        %v355 = vsel %vm350, %v347, 0
        %v357 = vsel %vm350, %v349, 0
        %359 = vmatpush.msra.mxu0 0.0
        %360 = vmatpush.msra.mxu0 0.0
        %361 = vmatpush.msra.mxu0 0.0
        %362 = vmatpush.msra.mxu0 0.0
        %363 = vmatpush.msra.mxu0 0.0
        %364 = vmatpush.msra.mxu0 0.0
        %365 = vmatpush.msra.mxu0 0.0
        %366 = vmatpush.msra.mxu0 0.0
        %367 = vmatpush.msra.mxu0 0.0
        %368 = vmatpush.msra.mxu0 0.0
        %369 = vmatpush.msra.mxu0 0.0
        %370 = vmatpush.msra.mxu0 0.0
        %371 = vmatpush.msra.mxu0 %v325
        %372 = vmatpush.msra.mxu0 %v324
        %373 = vmatpush.msra.mxu0 %v323
        %374 = vmatpush.msra.mxu0 %v322
        %375 = vmatmul.f32.gmra.mxu0 %v351
        %v376 = vpop.f32.mrf.mxu0
        %v377 = vadd.f32 %v328, %v376
        %378 = vmatmul.f32.gmra.mxu0 %v353
        %v379 = vpop.f32.mrf.mxu0
        %v380 = vadd.f32 %v332, %v379
        %381 = vmatmul.f32.gmra.mxu0 %v355
        %v382 = vpop.f32.mrf.mxu0
        %v383 = vadd.f32 %v336, %v382
        %384 = vmatmul.f32.gmra.mxu0 %v357
        %v385 = vpop.f32.mrf.mxu0
        %v386 = vadd.f32 %v340, %v385
        %387 = vdwg.mxu0
        %s388 = sld [smem:[#allocation3 + %s29]]
        %p389 = scmp.ne.s32.totalorder %s388, 2
        // Predicated region
        $region37: #{tpu_custom_call.1} parent=31 // pred_check
          %p390 = pneg %p389
        $region38: #{tpu_custom_call.1} parent=31 // pred_check_branch
          %392 = sbr.rel (%p390) target = $region40
        $region39: #{tpu_custom_call.1} parent=31 // pred_region
          %v393 = vperm.slane %v251, 7
          %394 = vset.pattern.permute.xlu0 2
          %395 = vperm.xlu0 %394, %v256
          %v396 = vpop.permute.xlu0 %395
          %398 = vset.pattern.permute.xlu0 2
          %399 = vperm.xlu0 %398, %v257
          %v400 = vpop.permute.xlu0 %399
          %402 = vset.pattern.permute.xlu0 2
          %403 = vperm.xlu0 %402, %v258
          %v404 = vpop.permute.xlu0 %403
          %406 = vset.pattern.permute.xlu0 2
          %407 = vperm.xlu0 %406, %v259
          %v408 = vpop.permute.xlu0 %407
          %v410 = vmul.f32 %v393, %v396
          %v411 = vmul.f32 %v393, %v400
          %v412 = vmul.f32 %v393, %v404
          %v413 = vmul.f32 %v393, %v408
          %414 = vset.pattern.permute.xlu0 3
          %415 = vperm.xlu0 %414, %v256
          %v416 = vpop.permute.xlu0 %415
          %418 = vset.pattern.permute.xlu0 3
          %419 = vperm.xlu0 %418, %v257
          %v420 = vpop.permute.xlu0 %419
          %422 = vset.pattern.permute.xlu0 3
          %423 = vperm.xlu0 %422, %v258
          %v424 = vpop.permute.xlu0 %423
          %426 = vset.pattern.permute.xlu0 3
          %427 = vperm.xlu0 %426, %v259
          %v428 = vpop.permute.xlu0 %427
          %v430 = vadd.f32 %v410, %v416
          %v431 = vadd.f32 %v411, %v420
          %v432 = vadd.f32 %v412, %v424
          %v433 = vadd.f32 %v413, %v428
          %v434 = vand.u32 2147483647, %v430
          %vm435 = vcmp.le.f32.partialorder %v434, 0.7853982
          %vm436 = vcmp.lt.s32.totalorder %v430, 0
          %v437 = vand.u32 %v430, 2139095040
          %v438 = vshrl.u32 %v437, 23
          %v439 = vsub.s32 %v438, 127
          %v440 = vand.u32 2147483647, %v430
          %v441 = vand.u32 %v440, 8388607
          %v442 = vor.u32 %v441, 8388608
          %v443 = vsub.s32 0, %v442
          %v444 = vadd.s32 %v439, 1
          %vm445 = vcmp.gt.s32.totalorder %v444, 0
          %v446 = vsel %vm445, %v444, 0
          %v447 = vshrl.u32 %v446, 5
          %v448 = vand.u32 %v446, 31
          %v449 = vsub.s32 32, %v448
          %v450 = vshrl.u32 683565275, %v449
          %v451 = vshll.u32 683565275, %v448
          %v452 = vshrl.u32 2475754826, %v449
          %v453 = vor.u32 %v451, %v452
          %v454 = vshll.u32 2475754826, %v448
          %v455 = vshrl.u32 2131351028, %v449
          %v456 = vor.u32 %v454, %v455
          %v457 = vshll.u32 2131351028, %v448
          %v458 = vshrl.u32 2102212464, %v449
          %v459 = vor.u32 %v457, %v458
          %v460 = vshll.u32 2102212464, %v448
          %v461 = vshrl.u32 920167782, %v449
          %v462 = vor.u32 %v460, %v461
          %v463 = vshll.u32 920167782, %v448
          %v464 = vshrl.u32 1326507024, %v449
          %v465 = vor.u32 %v463, %v464
          %vm466 = vcmp.lt.s32.totalorder %v447, 1
          %vm467 = vcmp.lt.s32.totalorder %v447, 2
          %vm468 = vcmp.lt.s32.totalorder %v447, 3
          %vm469 = vcmp.lt.s32.totalorder %v447, 4
          %v470 = vsel %vm466, %v450, %v453
          %v471 = vsel %vm469, %v459, 2102212464
          %v472 = vsel %vm468, %v456, %v471
          %v473 = vsel %vm467, %v470, %v472
          %v474 = vsel %vm466, %v453, %v456
          %v475 = vsel %vm469, %v462, 920167782
          %v476 = vsel %vm468, %v459, %v475
          %v477 = vsel %vm467, %v474, %v476
          %v478 = vsel %vm466, %v456, %v459
          %v479 = vsel %vm469, %v465, 1326507024
          %v480 = vsel %vm468, %v462, %v479
          %v481 = vsel %vm467, %v478, %v480
          %v482 = vshll.u32 %v442, 8
          %v483 = vand.u32 %v482, 65535
          %v484 = vshrl.u32 %v482, 16
          %v485 = vand.u32 %v481, 65535
          %v486 = vshrl.u32 %v481, 16
          %v487 = vmul.u32 %v483, %v485
          %v488 = vmul.u32 %v483, %v486
          %v489 = vmul.u32 %v484, %v485
          %v490 = vmul.u32 %v484, %v486
          %v491 = vshll.u32 %v488, 16
          %v492 = vshrl.u32 %v488, 16
          %v493 = vshll.u32 %v489, 16
          %v494 = vshrl.u32 %v489, 16
          %vm495 = vc.u32 %v487, %v491
          %v496 = vsel %vm495, 1, 0
          %v497 = vadd.s32 %v487, %v491
          %v498 = vadd.s32 %v490, %v496
          %vm499 = vc.u32 %v497, %v493
          %v500 = vsel %vm499, 1, 0
          %v501 = vadd.s32 %v497, %v493
          %v502 = vadd.s32 %v498, %v500
          %v503 = vadd.s32 %v502, %v492
          %v504 = vadd.s32 %v503, %v494
          %v505 = vand.u32 %v482, 65535
          %v506 = vshrl.u32 %v482, 16
          %v507 = vand.u32 %v477, 65535
          %v508 = vshrl.u32 %v477, 16
          %v509 = vmul.u32 %v505, %v507
          %v510 = vmul.u32 %v505, %v508
          %v511 = vmul.u32 %v506, %v507
          %v512 = vmul.u32 %v506, %v508
          %v513 = vshll.u32 %v510, 16
          %v514 = vshrl.u32 %v510, 16
          %v515 = vshll.u32 %v511, 16
          %v516 = vshrl.u32 %v511, 16
          %vm517 = vc.u32 %v509, %v513
          %v518 = vsel %vm517, 1, 0
          %v519 = vadd.s32 %v509, %v513
          %v520 = vadd.s32 %v512, %v518
          %vm521 = vc.u32 %v519, %v515
          %v522 = vsel %vm521, 1, 0
          %v523 = vadd.s32 %v519, %v515
          %v524 = vadd.s32 %v520, %v522
          %v525 = vadd.s32 %v524, %v514
          %v526 = vadd.s32 %v525, %v516
          %v527 = vmul.u32 %v482, %v473
          %v528 = vadd.s32 %v504, %v523
          %vm529 = vc.u32 %v504, %v523
          %v530 = vadd.s32 %v526, 1
          %v531 = vsel %vm529, %v530, %v526
          %v532 = vadd.s32 %v527, %v531
          %v533 = vadd.s32 %v532, 536870912
          %v534 = vshrl.u32 %v533, 30
          %v535 = vshll.u32 %v534, 30
          %v536 = vsub.s32 %v532, %v535
          %vm537 = vcmp.lt.s32.totalorder %v536, 0
          %v538 = vsub.s32 0, %v536
          %v539 = vsel %vm537, %v538, %v536
          %v540 = vclz %v539
          %v541 = vsub.s32 %v540, 2
          %vm542 = vcmp.gt.s32.totalorder 0, %v541
          %v543 = vsel %vm542, 0, %v541
          %v544 = vsub.s32 32, %v543
          %v545 = vshll.u32 %v536, %v543
          %v546 = vshrl.u32 %v528, %v544
          %v547 = vor.u32 %v545, %v546
          %v548 = vsub.s32 4294967266, %v543
          %v549 = vadd.s32 %v548, 127
          %v550 = vshll.u32 %v549, 23
          %v551 = vor.u32 4788187, %v550
          %v552 = vand.u32 2147483647, %v551
          %v554 = vcvt.s32.f32 %v547
          %v555 = vmul.f32 %v554, %v552
          %v556 = vxor.u32 %v555, 2147483648
          %v557 = vsel %vm436, %v556, %v555
          %v558 = vsub.s32 4, %v534
          %v559 = vsel %vm436, %v558, %v534
          %v560 = vsel %vm435, %v430, %v557
          %v561 = vsel %vm435, 0, %v559
          %v562 = vmul.f32 %v560, %v560
          %v563 = vmul.f32 %v562, -0.001358992
          %v564 = vadd.f32 %v563, 0.041655596
          %v565 = vmul.f32 %v562, %v564
          %v566 = vadd.f32 %v565, -0.4999988
          %v567 = vmul.f32 %v562, %v566
          %v568 = vadd.f32 1.0, %v567
          %v569 = vmul.f32 %v560, %v560
          %v570 = vmul.f32 %v569, -0.00019511016
          %v571 = vadd.f32 %v570, 0.008332121
          %v572 = vmul.f32 %v569, %v571
          %v573 = vadd.f32 %v572, -0.16666654
          %v574 = vmul.f32 %v569, %v573
          %v575 = vadd.f32 %v574, 1.0
          %v576 = vmul.f32 %v575, %v560
          %vm577 = vweird.f32 %v430
          %v578 = vadd.s32 %v561, 3
          %v579 = vand.u32 %v578, 3
          %vm580 = vcmp.lt.s32.totalorder %v579, 2
          %vm581 = vcmp.eq.s32.totalorder %v579, 0
          %v582 = vxor.u32 %v576, 2147483648
          %v583 = vsel %vm581, %v568, %v582
          %vm584 = vcmp.eq.s32.totalorder %v579, 2
          %v585 = vxor.u32 %v568, 2147483648
          %v586 = vsel %vm584, %v585, %v576
          %v587 = vsel %vm580, %v583, %v586
          %v588 = vsel %vm577, nan, %v587
          %v589 = vand.u32 2147483647, %v431
          %vm590 = vcmp.le.f32.partialorder %v589, 0.7853982
          %vm591 = vcmp.lt.s32.totalorder %v431, 0
          %v592 = vand.u32 %v431, 2139095040
          %v593 = vshrl.u32 %v592, 23
          %v594 = vsub.s32 %v593, 127
          %v595 = vand.u32 2147483647, %v431
          %v596 = vand.u32 %v595, 8388607
          %v597 = vor.u32 %v596, 8388608
          %v598 = vsub.s32 0, %v597
          %v599 = vadd.s32 %v594, 1
          %vm600 = vcmp.gt.s32.totalorder %v599, 0
          %v601 = vsel %vm600, %v599, 0
          %v602 = vshrl.u32 %v601, 5
          %v603 = vand.u32 %v601, 31
          %v604 = vsub.s32 32, %v603
          %v605 = vshrl.u32 683565275, %v604
          %v606 = vshll.u32 683565275, %v603
          %v607 = vshrl.u32 2475754826, %v604
          %v608 = vor.u32 %v606, %v607
          %v609 = vshll.u32 2475754826, %v603
          %v610 = vshrl.u32 2131351028, %v604
          %v611 = vor.u32 %v609, %v610
          %v612 = vshll.u32 2131351028, %v603
          %v613 = vshrl.u32 2102212464, %v604
          %v614 = vor.u32 %v612, %v613
          %v615 = vshll.u32 2102212464, %v603
          %v616 = vshrl.u32 920167782, %v604
          %v617 = vor.u32 %v615, %v616
          %v618 = vshll.u32 920167782, %v603
          %v619 = vshrl.u32 1326507024, %v604
          %v620 = vor.u32 %v618, %v619
          %vm621 = vcmp.lt.s32.totalorder %v602, 1
          %vm622 = vcmp.lt.s32.totalorder %v602, 2
          %vm623 = vcmp.lt.s32.totalorder %v602, 3
          %vm624 = vcmp.lt.s32.totalorder %v602, 4
          %v625 = vsel %vm621, %v605, %v608
          %v626 = vsel %vm624, %v614, 2102212464
          %v627 = vsel %vm623, %v611, %v626
          %v628 = vsel %vm622, %v625, %v627
          %v629 = vsel %vm621, %v608, %v611
          %v630 = vsel %vm624, %v617, 920167782
          %v631 = vsel %vm623, %v614, %v630
          %v632 = vsel %vm622, %v629, %v631
          %v633 = vsel %vm621, %v611, %v614
          %v634 = vsel %vm624, %v620, 1326507024
          %v635 = vsel %vm623, %v617, %v634
          %v636 = vsel %vm622, %v633, %v635
          %v637 = vshll.u32 %v597, 8
          %v638 = vand.u32 %v637, 65535
          %v639 = vshrl.u32 %v637, 16
          %v640 = vand.u32 %v636, 65535
          %v641 = vshrl.u32 %v636, 16
          %v642 = vmul.u32 %v638, %v640
          %v643 = vmul.u32 %v638, %v641
          %v644 = vmul.u32 %v639, %v640
          %v645 = vmul.u32 %v639, %v641
          %v646 = vshll.u32 %v643, 16
          %v647 = vshrl.u32 %v643, 16
          %v648 = vshll.u32 %v644, 16
          %v649 = vshrl.u32 %v644, 16
          %vm650 = vc.u32 %v642, %v646
          %v651 = vsel %vm650, 1, 0
          %v652 = vadd.s32 %v642, %v646
          %v653 = vadd.s32 %v645, %v651
          %vm654 = vc.u32 %v652, %v648
          %v655 = vsel %vm654, 1, 0
          %v656 = vadd.s32 %v652, %v648
          %v657 = vadd.s32 %v653, %v655
          %v658 = vadd.s32 %v657, %v647
          %v659 = vadd.s32 %v658, %v649
          %v660 = vand.u32 %v637, 65535
          %v661 = vshrl.u32 %v637, 16
          %v662 = vand.u32 %v632, 65535
          %v663 = vshrl.u32 %v632, 16
          %v664 = vmul.u32 %v660, %v662
          %v665 = vmul.u32 %v660, %v663
          %v666 = vmul.u32 %v661, %v662
          %v667 = vmul.u32 %v661, %v663
          %v668 = vshll.u32 %v665, 16
          %v669 = vshrl.u32 %v665, 16
          %v670 = vshll.u32 %v666, 16
          %v671 = vshrl.u32 %v666, 16
          %vm672 = vc.u32 %v664, %v668
          %v673 = vsel %vm672, 1, 0
          %v674 = vadd.s32 %v664, %v668
          %v675 = vadd.s32 %v667, %v673
          %vm676 = vc.u32 %v674, %v670
          %v677 = vsel %vm676, 1, 0
          %v678 = vadd.s32 %v674, %v670
          %v679 = vadd.s32 %v675, %v677
          %v680 = vadd.s32 %v679, %v669
          %v681 = vadd.s32 %v680, %v671
          %v682 = vmul.u32 %v637, %v628
          %v683 = vadd.s32 %v659, %v678
          %vm684 = vc.u32 %v659, %v678
          %v685 = vadd.s32 %v681, 1
          %v686 = vsel %vm684, %v685, %v681
          %v687 = vadd.s32 %v682, %v686
          %v688 = vadd.s32 %v687, 536870912
          %v689 = vshrl.u32 %v688, 30
          %v690 = vshll.u32 %v689, 30
          %v691 = vsub.s32 %v687, %v690
          %vm692 = vcmp.lt.s32.totalorder %v691, 0
          %v693 = vsub.s32 0, %v691
          %v694 = vsel %vm692, %v693, %v691
          %v695 = vclz %v694
          %v696 = vsub.s32 %v695, 2
          %vm697 = vcmp.gt.s32.totalorder 0, %v696
          %v698 = vsel %vm697, 0, %v696
          %v699 = vsub.s32 32, %v698
          %v700 = vshll.u32 %v691, %v698
          %v701 = vshrl.u32 %v683, %v699
          %v702 = vor.u32 %v700, %v701
          %v703 = vsub.s32 4294967266, %v698
          %v704 = vadd.s32 %v703, 127
          %v705 = vshll.u32 %v704, 23
          %v706 = vor.u32 4788187, %v705
          %v707 = vand.u32 2147483647, %v706
          %v709 = vcvt.s32.f32 %v702
          %v710 = vmul.f32 %v709, %v707
          %v711 = vxor.u32 %v710, 2147483648
          %v712 = vsel %vm591, %v711, %v710
          %v713 = vsub.s32 4, %v689
          %v714 = vsel %vm591, %v713, %v689
          %v715 = vsel %vm590, %v431, %v712
          %v716 = vsel %vm590, 0, %v714
          %v717 = vmul.f32 %v715, %v715
          %v718 = vmul.f32 %v717, -0.001358992
          %v719 = vadd.f32 %v718, 0.041655596
          %v720 = vmul.f32 %v717, %v719
          %v721 = vadd.f32 %v720, -0.4999988
          %v722 = vmul.f32 %v717, %v721
          %v723 = vadd.f32 1.0, %v722
          %v724 = vmul.f32 %v715, %v715
          %v725 = vmul.f32 %v724, -0.00019511016
          %v726 = vadd.f32 %v725, 0.008332121
          %v727 = vmul.f32 %v724, %v726
          %v728 = vadd.f32 %v727, -0.16666654
          %v729 = vmul.f32 %v724, %v728
          %v730 = vadd.f32 %v729, 1.0
          %v731 = vmul.f32 %v730, %v715
          %vm732 = vweird.f32 %v431
          %v733 = vadd.s32 %v716, 3
          %v734 = vand.u32 %v733, 3
          %vm735 = vcmp.lt.s32.totalorder %v734, 2
          %vm736 = vcmp.eq.s32.totalorder %v734, 0
          %v737 = vxor.u32 %v731, 2147483648
          %v738 = vsel %vm736, %v723, %v737
          %vm739 = vcmp.eq.s32.totalorder %v734, 2
          %v740 = vxor.u32 %v723, 2147483648
          %v741 = vsel %vm739, %v740, %v731
          %v742 = vsel %vm735, %v738, %v741
          %v743 = vsel %vm732, nan, %v742
          %v744 = vand.u32 2147483647, %v432
          %vm745 = vcmp.le.f32.partialorder %v744, 0.7853982
          %vm746 = vcmp.lt.s32.totalorder %v432, 0
          %v747 = vand.u32 %v432, 2139095040
          %v748 = vshrl.u32 %v747, 23
          %v749 = vsub.s32 %v748, 127
          %v750 = vand.u32 2147483647, %v432
          %v751 = vand.u32 %v750, 8388607
          %v752 = vor.u32 %v751, 8388608
          %v753 = vsub.s32 0, %v752
          %v754 = vadd.s32 %v749, 1
          %vm755 = vcmp.gt.s32.totalorder %v754, 0
          %v756 = vsel %vm755, %v754, 0
          %v757 = vshrl.u32 %v756, 5
          %v758 = vand.u32 %v756, 31
          %v759 = vsub.s32 32, %v758
          %v760 = vshrl.u32 683565275, %v759
          %v761 = vshll.u32 683565275, %v758
          %v762 = vshrl.u32 2475754826, %v759
          %v763 = vor.u32 %v761, %v762
          %v764 = vshll.u32 2475754826, %v758
          %v765 = vshrl.u32 2131351028, %v759
          %v766 = vor.u32 %v764, %v765
          %v767 = vshll.u32 2131351028, %v758
          %v768 = vshrl.u32 2102212464, %v759
          %v769 = vor.u32 %v767, %v768
          %v770 = vshll.u32 2102212464, %v758
          %v771 = vshrl.u32 920167782, %v759
          %v772 = vor.u32 %v770, %v771
          %v773 = vshll.u32 920167782, %v758
          %v774 = vshrl.u32 1326507024, %v759
          %v775 = vor.u32 %v773, %v774
          %vm776 = vcmp.lt.s32.totalorder %v757, 1
          %vm777 = vcmp.lt.s32.totalorder %v757, 2
          %vm778 = vcmp.lt.s32.totalorder %v757, 3
          %vm779 = vcmp.lt.s32.totalorder %v757, 4
          %v780 = vsel %vm776, %v760, %v763
          %v781 = vsel %vm779, %v769, 2102212464
          %v782 = vsel %vm778, %v766, %v781
          %v783 = vsel %vm777, %v780, %v782
          %v784 = vsel %vm776, %v763, %v766
          %v785 = vsel %vm779, %v772, 920167782
          %v786 = vsel %vm778, %v769, %v785
          %v787 = vsel %vm777, %v784, %v786
          %v788 = vsel %vm776, %v766, %v769
          %v789 = vsel %vm779, %v775, 1326507024
          %v790 = vsel %vm778, %v772, %v789
          %v791 = vsel %vm777, %v788, %v790
          %v792 = vshll.u32 %v752, 8
          %v793 = vand.u32 %v792, 65535
          %v794 = vshrl.u32 %v792, 16
          %v795 = vand.u32 %v791, 65535
          %v796 = vshrl.u32 %v791, 16
          %v797 = vmul.u32 %v793, %v795
          %v798 = vmul.u32 %v793, %v796
          %v799 = vmul.u32 %v794, %v795
          %v800 = vmul.u32 %v794, %v796
          %v801 = vshll.u32 %v798, 16
          %v802 = vshrl.u32 %v798, 16
          %v803 = vshll.u32 %v799, 16
          %v804 = vshrl.u32 %v799, 16
          %vm805 = vc.u32 %v797, %v801
          %v806 = vsel %vm805, 1, 0
          %v807 = vadd.s32 %v797, %v801
          %v808 = vadd.s32 %v800, %v806
          %vm809 = vc.u32 %v807, %v803
          %v810 = vsel %vm809, 1, 0
          %v811 = vadd.s32 %v807, %v803
          %v812 = vadd.s32 %v808, %v810
          %v813 = vadd.s32 %v812, %v802
          %v814 = vadd.s32 %v813, %v804
          %v815 = vand.u32 %v792, 65535
          %v816 = vshrl.u32 %v792, 16
          %v817 = vand.u32 %v787, 65535
          %v818 = vshrl.u32 %v787, 16
          %v819 = vmul.u32 %v815, %v817
          %v820 = vmul.u32 %v815, %v818
          %v821 = vmul.u32 %v816, %v817
          %v822 = vmul.u32 %v816, %v818
          %v823 = vshll.u32 %v820, 16
          %v824 = vshrl.u32 %v820, 16
          %v825 = vshll.u32 %v821, 16
          %v826 = vshrl.u32 %v821, 16
          %vm827 = vc.u32 %v819, %v823
          %v828 = vsel %vm827, 1, 0
          %v829 = vadd.s32 %v819, %v823
          %v830 = vadd.s32 %v822, %v828
          %vm831 = vc.u32 %v829, %v825
          %v832 = vsel %vm831, 1, 0
          %v833 = vadd.s32 %v829, %v825
          %v834 = vadd.s32 %v830, %v832
          %v835 = vadd.s32 %v834, %v824
          %v836 = vadd.s32 %v835, %v826
          %v837 = vmul.u32 %v792, %v783
          %v838 = vadd.s32 %v814, %v833
          %vm839 = vc.u32 %v814, %v833
          %v840 = vadd.s32 %v836, 1
          %v841 = vsel %vm839, %v840, %v836
          %v842 = vadd.s32 %v837, %v841
          %v843 = vadd.s32 %v842, 536870912
          %v844 = vshrl.u32 %v843, 30
          %v845 = vshll.u32 %v844, 30
          %v846 = vsub.s32 %v842, %v845
          %vm847 = vcmp.lt.s32.totalorder %v846, 0
          %v848 = vsub.s32 0, %v846
          %v849 = vsel %vm847, %v848, %v846
          %v850 = vclz %v849
          %v851 = vsub.s32 %v850, 2
          %vm852 = vcmp.gt.s32.totalorder 0, %v851
          %v853 = vsel %vm852, 0, %v851
          %v854 = vsub.s32 32, %v853
          %v855 = vshll.u32 %v846, %v853
          %v856 = vshrl.u32 %v838, %v854
          %v857 = vor.u32 %v855, %v856
          %v858 = vsub.s32 4294967266, %v853
          %v859 = vadd.s32 %v858, 127
          %v860 = vshll.u32 %v859, 23
          %v861 = vor.u32 4788187, %v860
          %v862 = vand.u32 2147483647, %v861
          %v864 = vcvt.s32.f32 %v857
          %v865 = vmul.f32 %v864, %v862
          %v866 = vxor.u32 %v865, 2147483648
          %v867 = vsel %vm746, %v866, %v865
          %v868 = vsub.s32 4, %v844
          %v869 = vsel %vm746, %v868, %v844
          %v870 = vsel %vm745, %v432, %v867
          %v871 = vsel %vm745, 0, %v869
          %v872 = vmul.f32 %v870, %v870
          %v873 = vmul.f32 %v872, -0.001358992
          %v874 = vadd.f32 %v873, 0.041655596
          %v875 = vmul.f32 %v872, %v874
          %v876 = vadd.f32 %v875, -0.4999988
          %v877 = vmul.f32 %v872, %v876
          %v878 = vadd.f32 1.0, %v877
          %v879 = vmul.f32 %v870, %v870
          %v880 = vmul.f32 %v879, -0.00019511016
          %v881 = vadd.f32 %v880, 0.008332121
          %v882 = vmul.f32 %v879, %v881
          %v883 = vadd.f32 %v882, -0.16666654
          %v884 = vmul.f32 %v879, %v883
          %v885 = vadd.f32 %v884, 1.0
          %v886 = vmul.f32 %v885, %v870
          %vm887 = vweird.f32 %v432
          %v888 = vadd.s32 %v871, 3
          %v889 = vand.u32 %v888, 3
          %vm890 = vcmp.lt.s32.totalorder %v889, 2
          %vm891 = vcmp.eq.s32.totalorder %v889, 0
          %v892 = vxor.u32 %v886, 2147483648
          %v893 = vsel %vm891, %v878, %v892
          %vm894 = vcmp.eq.s32.totalorder %v889, 2
          %v895 = vxor.u32 %v878, 2147483648
          %v896 = vsel %vm894, %v895, %v886
          %v897 = vsel %vm890, %v893, %v896
          %v898 = vsel %vm887, nan, %v897
          %v899 = vand.u32 2147483647, %v433
          %vm900 = vcmp.le.f32.partialorder %v899, 0.7853982
          %vm901 = vcmp.lt.s32.totalorder %v433, 0
          %v902 = vand.u32 %v433, 2139095040
          %v903 = vshrl.u32 %v902, 23
          %v904 = vsub.s32 %v903, 127
          %v905 = vand.u32 2147483647, %v433
          %v906 = vand.u32 %v905, 8388607
          %v907 = vor.u32 %v906, 8388608
          %v908 = vsub.s32 0, %v907
          %v909 = vadd.s32 %v904, 1
          %vm910 = vcmp.gt.s32.totalorder %v909, 0
          %v911 = vsel %vm910, %v909, 0
          %v912 = vshrl.u32 %v911, 5
          %v913 = vand.u32 %v911, 31
          %v914 = vsub.s32 32, %v913
          %v915 = vshrl.u32 683565275, %v914
          %v916 = vshll.u32 683565275, %v913
          %v917 = vshrl.u32 2475754826, %v914
          %v918 = vor.u32 %v916, %v917
          %v919 = vshll.u32 2475754826, %v913
          %v920 = vshrl.u32 2131351028, %v914
          %v921 = vor.u32 %v919, %v920
          %v922 = vshll.u32 2131351028, %v913
          %v923 = vshrl.u32 2102212464, %v914
          %v924 = vor.u32 %v922, %v923
          %v925 = vshll.u32 2102212464, %v913
          %v926 = vshrl.u32 920167782, %v914
          %v927 = vor.u32 %v925, %v926
          %v928 = vshll.u32 920167782, %v913
          %v929 = vshrl.u32 1326507024, %v914
          %v930 = vor.u32 %v928, %v929
          %vm931 = vcmp.lt.s32.totalorder %v912, 1
          %vm932 = vcmp.lt.s32.totalorder %v912, 2
          %vm933 = vcmp.lt.s32.totalorder %v912, 3
          %vm934 = vcmp.lt.s32.totalorder %v912, 4
          %v935 = vsel %vm931, %v915, %v918
          %v936 = vsel %vm934, %v924, 2102212464
          %v937 = vsel %vm933, %v921, %v936
          %v938 = vsel %vm932, %v935, %v937
          %v939 = vsel %vm931, %v918, %v921
          %v940 = vsel %vm934, %v927, 920167782
          %v941 = vsel %vm933, %v924, %v940
          %v942 = vsel %vm932, %v939, %v941
          %v943 = vsel %vm931, %v921, %v924
          %v944 = vsel %vm934, %v930, 1326507024
          %v945 = vsel %vm933, %v927, %v944
          %v946 = vsel %vm932, %v943, %v945
          %v947 = vshll.u32 %v907, 8
          %v948 = vand.u32 %v947, 65535
          %v949 = vshrl.u32 %v947, 16
          %v950 = vand.u32 %v946, 65535
          %v951 = vshrl.u32 %v946, 16
          %v952 = vmul.u32 %v948, %v950
          %v953 = vmul.u32 %v948, %v951
          %v954 = vmul.u32 %v949, %v950
          %v955 = vmul.u32 %v949, %v951
          %v956 = vshll.u32 %v953, 16
          %v957 = vshrl.u32 %v953, 16
          %v958 = vshll.u32 %v954, 16
          %v959 = vshrl.u32 %v954, 16
          %vm960 = vc.u32 %v952, %v956
          %v961 = vsel %vm960, 1, 0
          %v962 = vadd.s32 %v952, %v956
          %v963 = vadd.s32 %v955, %v961
          %vm964 = vc.u32 %v962, %v958
          %v965 = vsel %vm964, 1, 0
          %v966 = vadd.s32 %v962, %v958
          %v967 = vadd.s32 %v963, %v965
          %v968 = vadd.s32 %v967, %v957
          %v969 = vadd.s32 %v968, %v959
          %v970 = vand.u32 %v947, 65535
          %v971 = vshrl.u32 %v947, 16
          %v972 = vand.u32 %v942, 65535
          %v973 = vshrl.u32 %v942, 16
          %v974 = vmul.u32 %v970, %v972
          %v975 = vmul.u32 %v970, %v973
          %v976 = vmul.u32 %v971, %v972
          %v977 = vmul.u32 %v971, %v973
          %v978 = vshll.u32 %v975, 16
          %v979 = vshrl.u32 %v975, 16
          %v980 = vshll.u32 %v976, 16
          %v981 = vshrl.u32 %v976, 16
          %vm982 = vc.u32 %v974, %v978
          %v983 = vsel %vm982, 1, 0
          %v984 = vadd.s32 %v974, %v978
          %v985 = vadd.s32 %v977, %v983
          %vm986 = vc.u32 %v984, %v980
          %v987 = vsel %vm986, 1, 0
          %v988 = vadd.s32 %v984, %v980
          %v989 = vadd.s32 %v985, %v987
          %v990 = vadd.s32 %v989, %v979
          %v991 = vadd.s32 %v990, %v981
          %v992 = vmul.u32 %v947, %v938
          %v993 = vadd.s32 %v969, %v988
          %vm994 = vc.u32 %v969, %v988
          %v995 = vadd.s32 %v991, 1
          %v996 = vsel %vm994, %v995, %v991
          %v997 = vadd.s32 %v992, %v996
          %v998 = vadd.s32 %v997, 536870912
          %v999 = vshrl.u32 %v998, 30
          %v1000 = vshll.u32 %v999, 30
          %v1001 = vsub.s32 %v997, %v1000
          %vm1002 = vcmp.lt.s32.totalorder %v1001, 0
          %v1003 = vsub.s32 0, %v1001
          %v1004 = vsel %vm1002, %v1003, %v1001
          %v1005 = vclz %v1004
          %v1006 = vsub.s32 %v1005, 2
          %vm1007 = vcmp.gt.s32.totalorder 0, %v1006
          %v1008 = vsel %vm1007, 0, %v1006
          %v1009 = vsub.s32 32, %v1008
          %v1010 = vshll.u32 %v1001, %v1008
          %v1011 = vshrl.u32 %v993, %v1009
          %v1012 = vor.u32 %v1010, %v1011
          %v1013 = vsub.s32 4294967266, %v1008
          %v1014 = vadd.s32 %v1013, 127
          %v1015 = vshll.u32 %v1014, 23
          %v1016 = vor.u32 4788187, %v1015
          %v1017 = vand.u32 2147483647, %v1016
          %v1019 = vcvt.s32.f32 %v1012
          %v1020 = vmul.f32 %v1019, %v1017
          %v1021 = vxor.u32 %v1020, 2147483648
          %v1022 = vsel %vm901, %v1021, %v1020
          %v1023 = vsub.s32 4, %v999
          %v1024 = vsel %vm901, %v1023, %v999
          %v1025 = vsel %vm900, %v433, %v1022
          %v1026 = vsel %vm900, 0, %v1024
          %v1027 = vmul.f32 %v1025, %v1025
          %v1028 = vmul.f32 %v1027, -0.001358992
          %v1029 = vadd.f32 %v1028, 0.041655596
          %v1030 = vmul.f32 %v1027, %v1029
          %v1031 = vadd.f32 %v1030, -0.4999988
          %v1032 = vmul.f32 %v1027, %v1031
          %v1033 = vadd.f32 1.0, %v1032
          %v1034 = vmul.f32 %v1025, %v1025
          %v1035 = vmul.f32 %v1034, -0.00019511016
          %v1036 = vadd.f32 %v1035, 0.008332121
          %v1037 = vmul.f32 %v1034, %v1036
          %v1038 = vadd.f32 %v1037, -0.16666654
          %v1039 = vmul.f32 %v1034, %v1038
          %v1040 = vadd.f32 %v1039, 1.0
          %v1041 = vmul.f32 %v1040, %v1025
          %vm1042 = vweird.f32 %v433
          %v1043 = vadd.s32 %v1026, 3
          %v1044 = vand.u32 %v1043, 3
          %vm1045 = vcmp.lt.s32.totalorder %v1044, 2
          %vm1046 = vcmp.eq.s32.totalorder %v1044, 0
          %v1047 = vxor.u32 %v1041, 2147483648
          %v1048 = vsel %vm1046, %v1033, %v1047
          %vm1049 = vcmp.eq.s32.totalorder %v1044, 2
          %v1050 = vxor.u32 %v1033, 2147483648
          %v1051 = vsel %vm1049, %v1050, %v1041
          %v1052 = vsel %vm1045, %v1048, %v1051
          %v1053 = vsel %vm1042, nan, %v1052
          %v1054 = vadd.f32 %v377, %v588
          %v1055 = vadd.f32 %v380, %v743
          %v1056 = vadd.f32 %v383, %v898
          %v1057 = vadd.f32 %v386, %v1053
          %1058 = vst [vmem:[%s236] sm:$0xff] %v1054
          %1059 = vst [vmem:[%s236 + $0x8] sm:$0xff] %v1055
          %1060 = vst [vmem:[%s236 + $0x10] sm:$0xff] %v1056
          %1061 = vst [vmem:[%s236 + $0x18] sm:$0xff] %v1057
        $region40: #{tpu_custom_call.1} parent=31 // pred_fallthru
          _
        %p1062 = scmp.eq.s32.totalorder %s388, 2
        // Predicated region
        $region41: #{tpu_custom_call.1} parent=31 // pred_check
          %p1063 = pneg %p1062
        $region42: #{tpu_custom_call.1} parent=31 // pred_check_branch
          %1065 = sbr.rel (%p1063) target = $region44
        $region43: #{tpu_custom_call.1} parent=31 // pred_region
          %1066 = vst [vmem:[%s236] sm:$0xff] %v377
          %1067 = vst [vmem:[%s236 + $0x8] sm:$0xff] %v380
          %1068 = vst [vmem:[%s236 + $0x10] sm:$0xff] %v383
          %1069 = vst [vmem:[%s236 + $0x18] sm:$0xff] %v386
        $region44: #{tpu_custom_call.1} parent=31 // pred_fallthru
          _
        %s1070 = sand.u32 %s119, 1
        %s1071 = scalar_lea.sflag [#allocation6], %s1070
        %s1072 = sand.u32 %s119, 1
        %s1073 = smul.addr %s1072, 32
        %s1074 = scalar_lea.vmem [#allocation7], %s1073
        // Predicated region
        $region45: #{tpu_custom_call.1} parent=31 // pred_check
          %p1075 = pneg %p129
        $region46: #{tpu_custom_call.1} parent=31 // pred_check_branch
          %1077 = sbr.rel (%p1075) target = $region48
        $region47: #{tpu_custom_call.1} parent=31 // pred_region
          %1079 = vsyncadd %s1071, 0
          %s1080 = smul.addr %s29, 8
          %s1081 = scalar_lea.hbm %s4, %s1080
          %s1082 = sshll.u32 %s1074, 4
          %s1083 = int_to_ptr.vmem [resolvable:$true] %s1082
          %s1084 = sshll.u32 %s1081, 4
          %s1085 = int_to_ptr.hbm [resolvable:$true] %s1084
          %1090 = dma.vmem_to_hbm [thread:$0]  %s1083, 512, %s1085, %s1071, 128, 384, 8
        $region48: #{tpu_custom_call.1} parent=31 // pred_fallthru
          _
      $region32: #{tpu_custom_call.1} parent=5 // pred_fallthru
        _
      %p1091 = scmp.le.s32.totalorder 2, %s24
      // Predicated region
      $region49: #{tpu_custom_call.1} parent=5 // pred_check
        %p1092 = pneg %p1091
      $region50: #{tpu_custom_call.1} parent=5 // pred_check_branch
        %1094 = sbr.rel (%p1092) target = $region52
      $region51: #{tpu_custom_call.1} parent=5 // pred_region
        %s1095 = ssub.s32 %s24, 2
        // Predicated region
        $region53: #{tpu_custom_call.1} parent=51 // pred_check
          %p1096 = pneg %p135
        $region54: #{tpu_custom_call.1} parent=51 // pred_check_branch
          %1098 = sbr.rel (%p1096) target = $region56
        $region55: #{tpu_custom_call.1} parent=51 // pred_region
          %s1099 = sand.u32 %s120, 1
          %s1100 = scalar_lea.sflag [#allocation6], %s1099
          %s1101 = sand.u32 %s120, 1
          %s1102 = smul.addr %s1101, 32
          %s1103 = scalar_lea.vmem [#allocation7], %s1102
          %1105 = dma.done %s1100, 512
        $region56: #{tpu_custom_call.1} parent=51 // pred_fallthru
          _
      $region52: #{tpu_custom_call.1} parent=5 // pred_fallthru
        _
    $region6: #{tpu_custom_call.1} parent=1 // loop_footer
      %s28 = sadd.s32 1, %s24
    $region7: #{tpu_custom_call.1} parent=1 // loop_footer_branch
      %23 = sbr.rel target = $region3
    $region8: #{tpu_custom_call.1} parent=1 // loop_exit
      _
    %1106 = vsyncpa [#allocation5], 1
    %s1107 = scalar_lea.sflag [#allocation5], 1
    %1108 = vsyncpa %s1107, 1
    %1109 = vsyncpa [#allocation6], 1
    %s1110 = scalar_lea.sflag [#allocation6], 1
    %1111 = vsyncpa %s1110, 1

</llo_original>
